<compile_context>
chip_gen: v5e
topology: v5e:2x2
jax: 0.10.0
libtpu: 0.0.40
codegen_flags: <defaults>
</compile_context>

<pallas_src>
import jax
import jax.numpy as jnp
from jax.experimental import pallas as pl
from jax.experimental.pallas import tpu as pltpu


def _get_pos_encode(max_seq_len: int, d_model: int) -> jnp.ndarray:
    """Sinusoidal positional-encoding table, same math as the torch module."""
    pos = jnp.arange(max_seq_len, dtype=jnp.float32)[:, None]          # (L, 1)
    i = jnp.arange(d_model, dtype=jnp.float32)[None, :]                # (1, D)
    # pos / 10000 ** (2 * (i // 2) / d_model)
    angle = pos / jnp.power(10000.0, 2.0 * jnp.floor(i / 2.0) / d_model)
    even_mask = (jnp.arange(d_model) % 2 == 0)[None, :]
    return jnp.where(even_mask, jnp.sin(angle), jnp.cos(angle)).astype(jnp.float32)


def _round_up(v: int, m: int) -> int:
    return -(-v // m) * m


def _vmem_budget_bytes() -> int:
    """Generation-aware budget for the block working set (incl. double-buffering)."""
    try:
        info = pltpu.get_tpu_info()
        cap = int(getattr(info, "vmem_capacity_bytes", 64 << 20))
    except Exception:
        cap = 64 << 20                      # conservative (v7x per-core VMEM)
    # ~1/4 of physical, capped: ~24 MiB on v5e/v6e (128 MiB), ~16 MiB on v7x (64 MiB).
    return int(min(24 << 20, max(8 << 20, cap // 4)))


def _add_pos_kernel(x_ref, pe_ref, o_ref):
    # x_ref/o_ref: (R, TW) lane-dense tiles; pe_ref: (1, TW) or (8, TW).
    # Keep the add in f32 (v5e has no bf16 VPU); cast only at the final store.
    x = x_ref[...].astype(jnp.float32)
    pe = pe_ref[...].astype(jnp.float32)
    rx, rp = x.shape[0], pe.shape[0]
    if rp == 1 or rp == rx:
        y = x + pe                                       # plain row-broadcast add
    else:
        # Folded small-batch layout: x rows are (batch, 8) groups, pe holds the
        # 8-row pattern. Split the sublane axis by exactly 8 (layout-preserving).
        y = (x.reshape(rx // rp, rp, x.shape[1]) + pe[None, :, :]).reshape(rx, x.shape[1])
    o_ref[...] = y.astype(o_ref.dtype)


def positional_encode(x: jnp.ndarray, pos_encode: jnp.ndarray, *,
                      max_tile_cols: int = 32768) -> jnp.ndarray:
    """x: (B, S, D); pos_encode: (L, D) f32 table. Returns x + pe[:S] over batch."""
    B, S, D = x.shape
    L, D2 = pos_encode.shape
    assert D2 == D, "d_model mismatch between x and pos_encode"
    assert S <= L, "sequence length exceeds max_seq_len of the PE table"
    max_tile_cols = max(128, (max_tile_cols // 128) * 128)

    total = S * D
    itemsize = jnp.dtype(x.dtype).itemsize
    pe_itemsize = jnp.dtype(pos_encode.dtype).itemsize

    # ---- layout: choose flattening -------------------------------------------------
    fold = (B < 8) and (total % (8 * 128) == 0) and (total >= 8 * 128)
    if fold:
        # Small batch: avoid sublane padding of a (B, tw) block by folding 8 row
        # groups of the sequence into the batch axis.
        rows, cols, pe_rows = B * 8, total // 8, 8
        x2 = x.reshape(rows, cols)
        pe2 = pos_encode[:S, :].reshape(pe_rows, cols)
    else:
        rows, cols, pe_rows = B, total, 1
        x2 = x.reshape(rows, cols)
        if total % 128 == 0:
            # Zero-copy reshape of the full table: its flat prefix coincides with
            # pe[:S, :] in row-major layout, so index_map column slicing is valid.
            pe2 = pos_encode.reshape(1, L * D)
        else:
            pe2 = pos_encode[:S, :].reshape(1, total)

    # ---- row (batch) tiling: multiple of 8 or the full extent ----------------------
    br = rows if rows <= 256 else 256
    n_row = pl.cdiv(rows, br)

    # ---- column (lane) tiling: largest 128-multiple fitting the VMEM budget --------
    sub = max(8, 32 // itemsize)                         # sublane packing granularity
    xr = _round_up(br, sub)                              # physical rows of x/out blocks
    per = _round_up(pe_rows, 8)                          # physical rows of the PE block
    # double-buffered (x in + out) blocks + double-buffered PE block, per lane column
    bytes_per_col = 2 * (2 * xr * itemsize + per * pe_itemsize)
    budget = _vmem_budget_bytes()
    tw = max(128, (budget // bytes_per_col) // 128 * 128)
    tw = min(tw, max_tile_cols, _round_up(cols, 128))
    n_col = pl.cdiv(cols, tw)                            # ragged last tile is masked

    # ---- v7x megacore: guarantee >= 2 parallel steps for large problems ------------
    if n_col * n_row == 1 and rows * cols * itemsize >= (4 << 20) and tw >= 256:
        tw = _round_up(pl.cdiv(cols, 2), 128)
        n_col = pl.cdiv(cols, tw)

    est_vmem = bytes_per_col * tw + (1 << 20)
    vmem_limit = int(min(48 << 20, max(32 << 20, 2 * est_vmem)))

    cost = pl.CostEstimate(
        flops=rows * cols,
        transcendentals=0,
        bytes_accessed=2 * rows * cols * itemsize + pe2.size * pe_itemsize,
    )

    out2 = pl.pallas_call(
        _add_pos_kernel,
        out_shape=jax.ShapeDtypeStruct((rows, cols), x.dtype),
        grid_spec=pltpu.PrefetchScalarGridSpec(
            num_scalar_prefetch=0,
            # Column axis OUTER, row axis inner: the PE block index stays constant
            # across consecutive row tiles, so its DMA is skipped.
            grid=(n_col, n_row),
            in_specs=[
                pl.BlockSpec((br, tw), lambda j, i: (i, j)),        # x tile
                pl.BlockSpec((pe_rows, tw), lambda j, i: (0, j)),   # PE tile (reused)
            ],
            out_specs=pl.BlockSpec((br, tw), lambda j, i: (i, j)),
        ),
        compiler_params=pltpu.CompilerParams(
            dimension_semantics=("parallel", "parallel"),  # shard across TCs (v7x)
            vmem_limit_bytes=vmem_limit,
        ),
        cost_estimate=cost,
    )(x2, pe2)

    return out2.reshape(B, S, D)


if __name__ == "__main__":
    d_model = 32
    max_seq_len = 512
    key = jax.random.PRNGKey(0)

    pos_encode = _get_pos_encode(max_seq_len, d_model)

    def ref(x):
        s = x.shape[1]
        return (x.astype(jnp.float32) + pos_encode[:s, :][None, :, :]).astype(x.dtype)

    # 1) Module-sized example: batch=2, seq=8, d_model=32, f32.
    x = jax.random.normal(key, (2, 8, d_model), dtype=jnp.float32)
    out = jax.block_until_ready(positional_encode(x, pos_encode))
    assert jnp.allclose(out, ref(x), atol=1e-6, rtol=1e-6)

    # 2) bf16 in -> bf16 out (halves HBM traffic; f32 math inside the kernel).
    xb = x.astype(jnp.bfloat16)
    outb = jax.block_until_ready(positional_encode(xb, pos_encode))
    assert jnp.allclose(outb.astype(jnp.float32), ref(xb).astype(jnp.float32),
                        atol=1e-2, rtol=1e-2)

    # 3) Folded small-batch layout: B<8, S*D multiple of 1024 -> (B*8, S*D/8) blocks.
    x3 = jax.random.normal(key, (2, 256, d_model), dtype=jnp.float32)
    out3 = jax.block_until_ready(positional_encode(x3, pos_encode))
    assert jnp.allclose(out3, ref(x3), atol=1e-6, rtol=1e-6)

    # 4) Batch-tiled rows (B>256), ragged row + column tiles, S*D not a 128 multiple.
    x4 = jax.random.normal(key, (260, 10, d_model), dtype=jnp.float32)
    out4 = jax.block_until_ready(positional_encode(x4, pos_encode, max_tile_cols=128))
    assert jnp.allclose(out4, ref(x4), atol=1e-6, rtol=1e-6)

    print("KERNEL_OK")
</pallas_src>

<mosaic_0001>
module attributes {stable_mosaic.version = 11 : i64} {
  func.func @_add_pos_kernel(%arg0: i32, %arg1: i32, %arg2: memref<2x256xf32, #tpu.memory_space<vmem>>, %arg3: memref<1x256xf32, #tpu.memory_space<vmem>>, %arg4: memref<2x256xf32, #tpu.memory_space<vmem>>) attributes {dimension_semantics = [#tpu.dimension_semantics<parallel>, #tpu.dimension_semantics<parallel>], iteration_bounds = array<i64: 1, 1>, scalar_prefetch = 0 : i64, scratch_operands = 0 : i64, tpu.core_type = #tpu.core_type<tc>, window_params = [{transform_indices = @transform_0, window_bounds = array<i64: 2, 256>}, {transform_indices = @transform_1, window_bounds = array<i64: 1, 256>}, {transform_indices = @transform_2, window_bounds = array<i64: 2, 256>}]} {
    %c0 = arith.constant 0 : index
    %c0_0 = arith.constant 0 : index
    %0 = vector.load %arg2[%c0, %c0_0] : memref<2x256xf32, #tpu.memory_space<vmem>>, vector<2x256xf32>
    %c0_1 = arith.constant 0 : index
    %c0_2 = arith.constant 0 : index
    %1 = vector.load %arg3[%c0_1, %c0_2] : memref<1x256xf32, #tpu.memory_space<vmem>>, vector<1x256xf32>
    %2 = vector.broadcast %1 : vector<1x256xf32> to vector<2x256xf32>
    %3 = arith.addf %0, %2 : vector<2x256xf32>
    %c0_3 = arith.constant 0 : index
    %c0_4 = arith.constant 0 : index
    %4 = vector.load %arg4[%c0_3, %c0_4] : memref<2x256xf32, #tpu.memory_space<vmem>>, vector<2x256xf32>
    tpu.vector_store %arg4[%c0_3, %c0_4], %3 {strides = array<i32>} : memref<2x256xf32, #tpu.memory_space<vmem>>, vector<2x256xf32>,
    return
  }
  func.func @transform_0(%arg0: i32, %arg1: i32) -> (i32, i32) {
    %c0_i32 = arith.constant 0 : i32
    return %arg1, %arg0 : i32, i32
  }
  func.func @transform_1(%arg0: i32, %arg1: i32) -> (i32, i32) {
    %c0_i32 = arith.constant 0 : i32
    %c0_i32_0 = arith.constant 0 : i32
    return %c0_i32, %arg0 : i32, i32
  }
  func.func @transform_2(%arg0: i32, %arg1: i32) -> (i32, i32) {
    %c0_i32 = arith.constant 0 : i32
    return %arg1, %arg0 : i32, i32
  }
}

</mosaic_0001>

<llo_original>
// kernel: tpu_custom_call.1
$region0: #{tpu_custom_call.1}
  #allocation0 [shape = 'u32[]', space=smem, size = 0x4, offset = 0x4, fixed_abs, tag = 'smem constant byte address 0x4 - core index']
  #allocation1 [shape = 'u32[72,128]{1,0:T(1,128)}', space=vmem, size = 0x9000, scoped, tag = 'internal scratch']
  %s0 = inlined_call_operand.hbm [shape: f32[2,256], index: 0, kind: input, shape index: {}]
  %s1 = inlined_call_operand.hbm [shape: f32[1,16384], index: 1, kind: input, shape index: {}]
  %s2 = inlined_call_operand.hbm [shape: f32[2,256], index: 2, kind: output, shape index: {}]
  %s3 = sld [smem:[#allocation0]]
  $region26: #{tpu_custom_call.1} parent=0
    _
  %s5 = ssub.s32 1, %s3
  %s6 = scalar_select 0, %s5, %s3
  $region1: #{tpu_custom_call.1} parent=0
    #allocation2 [shape = 'u8[2048]{0}', space=vmem, size = 0x800, scoped, tag = 'input window, operand 0, single buffered']
    #allocation3 [shape = 's32[1]{0}', space=sflag, size = 0x4, scoped, tag = 'scoped memory for tpu_custom_call.1']
    #allocation4 [shape = 's32[1]{0}', space=sflag, size = 0x4, scoped, tag = 'scoped memory for tpu_custom_call.1']
    #allocation5 [shape = 'u8[1024]{0}', space=vmem, size = 0x400, scoped, tag = 'input window, operand 1, single buffered']
    #allocation6 [shape = 's32[1]{0}', space=sflag, size = 0x4, scoped, tag = 'scoped memory for tpu_custom_call.1']
    #allocation7 [shape = 'u8[2048]{0}', space=vmem, size = 0x800, scoped, tag = 'output window, operand 0, single buffered']
    %7 = vsyncpa [#allocation3], 0
    %8 = vsyncpa [#allocation6], 0
    %9 = vsyncpa [#allocation4], 0
    // Predicated region
    $region2: #{tpu_custom_call.1} parent=1 // pred_check
      _
    $region3: #{tpu_custom_call.1} parent=1 // pred_check_branch
      %11 = sbr.rel (0) target = $region5
    $region4: #{tpu_custom_call.1} parent=1 // pred_region
      %13 = vsyncadd [#allocation3], 0
      %s15 = sshll.u32 %s0, 4
      %s16 = int_to_ptr.hbm [resolvable:$true] %s15
      %s17 = sshll.u32 [#allocation2], 4
      %s18 = int_to_ptr.vmem [resolvable:$true] %s17
      %20 = dma.hbm_to_vmem [thread:$0]  %s16, 64, %s18, [#allocation3]
    $region5: #{tpu_custom_call.1} parent=1 // pred_fallthru
      _
    // Predicated region
    $region6: #{tpu_custom_call.1} parent=1 // pred_check
      _
    $region7: #{tpu_custom_call.1} parent=1 // pred_check_branch
      %22 = sbr.rel (0) target = $region9
    $region8: #{tpu_custom_call.1} parent=1 // pred_region
      %24 = vsyncadd [#allocation6], 0
      %s26 = sshll.u32 %s1, 4
      %s27 = int_to_ptr.hbm [resolvable:$true] %s26
      %s28 = sshll.u32 [#allocation5], 4
      %s29 = int_to_ptr.vmem [resolvable:$true] %s28
      %31 = dma.hbm_to_vmem [thread:$0]  %s27, 32, %s29, [#allocation6]
    $region9: #{tpu_custom_call.1} parent=1 // pred_fallthru
      _
    // Predicated region
    $region10: #{tpu_custom_call.1} parent=1 // pred_check
      _
    $region11: #{tpu_custom_call.1} parent=1 // pred_check_branch
      %33 = sbr.rel (0) target = $region13
    $region12: #{tpu_custom_call.1} parent=1 // pred_region
      %35 = dma.done [#allocation3], 64
    $region13: #{tpu_custom_call.1} parent=1 // pred_fallthru
      _
    // Predicated region
    $region14: #{tpu_custom_call.1} parent=1 // pred_check
      _
    $region15: #{tpu_custom_call.1} parent=1 // pred_check_branch
      %37 = sbr.rel (0) target = $region17
    $region16: #{tpu_custom_call.1} parent=1 // pred_region
      %39 = dma.done [#allocation6], 32
    $region17: #{tpu_custom_call.1} parent=1 // pred_fallthru
      _
    %v40 = vld [vmem:[#allocation2] sm:$0xf]
    %v41 = vld [vmem:[#allocation5] sm:$0x3]
    %v43 = vperm.slane %v41, 0
    %v44 = vperm.slane %v41, 1
    %v45 = vrot.slane %v44, 6
    %vm46 = vcmask 1041408
    %v47 = vsel %vm46, %v43, %v45
    %v49 = vadd.f32 %v40, %v47
    %50 = vst [vmem:[#allocation7] sm:$0xf] %v49
    // Predicated region
    $region18: #{tpu_custom_call.1} parent=1 // pred_check
      _
    $region19: #{tpu_custom_call.1} parent=1 // pred_check_branch
      %52 = sbr.rel (0) target = $region21
    $region20: #{tpu_custom_call.1} parent=1 // pred_region
      %54 = vsyncadd [#allocation4], 0
      %s56 = sshll.u32 [#allocation7], 4
      %s57 = int_to_ptr.vmem [resolvable:$true] %s56
      %s58 = sshll.u32 %s2, 4
      %s59 = int_to_ptr.hbm [resolvable:$true] %s58
      %61 = dma.vmem_to_hbm [thread:$0]  %s57, 64, %s59, [#allocation4]
    $region21: #{tpu_custom_call.1} parent=1 // pred_fallthru
      _
    // Predicated region
    $region22: #{tpu_custom_call.1} parent=1 // pred_check
      _
    $region23: #{tpu_custom_call.1} parent=1 // pred_check_branch
      %63 = sbr.rel (0) target = $region25
    $region24: #{tpu_custom_call.1} parent=1 // pred_region
      %65 = dma.done [#allocation4], 64
    $region25: #{tpu_custom_call.1} parent=1 // pred_fallthru
      _
    %66 = vsyncpa [#allocation3], 1
    %67 = vsyncpa [#allocation6], 1
    %68 = vsyncpa [#allocation4], 1

</llo_original>
